<compile_context>
chip_gen: v7x
topology: tpu7x:2x2x1
jax: 0.10.0
libtpu: 0.0.40
codegen_flags: <defaults>
</compile_context>

<pallas_src>
import jax
import jax.numpy as jnp
from jax.experimental import pallas as pl
from jax.experimental.pallas import tpu as pltpu


def _round_up(x, m):
    return (x + m - 1) // m * m


def _predictor_kernel(x_ref, w1t_ref, b1_ref, w2t_ref, b2_ref, o_ref):
    # Lane-dense, pixel-on-lane orientation:
    #   x_ref  : [Cin,    TM]     bf16  tile of flattened pixels (X^T)
    #   w1t_ref: [4*Cmid, Cin]    bf16  4 deconv taps stacked on sublanes
    #   b1_ref : [4*Cmid, 1]      f32
    #   w2t_ref: [4*nc,   4*Cmid] f32   block-diagonal 1x1-conv weight (transposed)
    #   b2_ref : [4*nc,   1]      f32
    #   o_ref  : [4*nc,   TM]     out dtype (bf16 by default)
    # GEMM1 on the MXU: bf16 operands, f32 accumulation.
    h = jnp.dot(w1t_ref[...], x_ref[...], preferred_element_type=jnp.float32)
    h = jnp.maximum(h + b1_ref[...], 0.0)                    # bias + ReLU (VPU, f32)
    # GEMM2 kept fully in f32 (tiny; memory-bound kernel) -> no bf16 double
    # rounding between the two convs.  Single K=4*Cmid dot, not 4 split dots.
    logits = jnp.dot(w2t_ref[...], h, preferred_element_type=jnp.float32)
    o_ref[...] = (logits + b2_ref[...]).astype(o_ref.dtype)


def maskrcnn_c4_predictor(x_nchw, w1, b1, w2, b2, *, tm_max=16384,
                          out_dtype=jnp.bfloat16):
    """PyTorch-equivalent forward: x [N, Cin, H, W] -> logits [N, nc, 2H, 2W].

    Pass out_dtype=jnp.float32 for a bit-faithful PyTorch output dtype; bf16
    (default) halves the logits HBM write in this memory-bound op.
    """
    N, Cin, H, W = x_nchw.shape
    Cin_w, Cmid, kH, kW = w1.shape
    assert (Cin_w, kH, kW) == (Cin, 2, 2), (w1.shape, x_nchw.shape)
    nc = w2.shape[0]
    M = N * H * W

    # ---- fused-GEMM operands (tap axis k = di*2 + dj fused onto sublanes) ----
    # w1t[k*Cmid + m, cin] = w1[cin, m, di, dj]
    w1t = jnp.transpose(w1, (2, 3, 1, 0)).reshape(4 * Cmid, Cin).astype(jnp.bfloat16)
    w2_mat = w2.reshape(nc, Cmid).astype(jnp.float32)                  # [nc, Cmid]
    w2t_bd = jnp.kron(jnp.eye(4, dtype=jnp.float32), w2_mat)           # [4*nc, 4*Cmid]
    b1_all = jnp.tile(b1.astype(jnp.float32), 4).reshape(4 * Cmid, 1)
    b2_all = jnp.tile(b2.astype(jnp.float32), 4).reshape(4 * nc, 1)

    # ---- pixel-on-lane input: ONE transpose pass, fused with the bf16 cast ----
    # (For N == 1 XLA lowers this transpose to a free reshape.)
    x_t = jnp.transpose(x_nchw, (1, 0, 2, 3)).reshape(Cin, M).astype(jnp.bfloat16)

    # ---- tile the pixel (lane) axis: big lane-dense tiles, always >= 2 steps ----
    # >= 2 grid steps keeps BlockSpec double-buffering (DMA/compute overlap)
    # alive, and an even step count keeps both v7x TensorCores busy; tm is
    # derived from M instead of padding M up to a fixed tile.
    n_steps = max(2, pl.cdiv(M, tm_max))
    n_steps += n_steps % 2                       # even step count (v7x megacore)
    tm = _round_up(pl.cdiv(M, n_steps), 128)     # lane-dense: multiple of 128
    m_pad = tm * n_steps
    if m_pad != M:
        # NOTE: padded columns produce relu(b1) @ W2 + b2 garbage; it is sliced
        # off below and never consumed.
        x_t = jnp.pad(x_t, ((0, 0), (0, m_pad - M)))

    out_bytes = jnp.dtype(out_dtype).itemsize
    cost = pl.CostEstimate(
        flops=2 * m_pad * Cin * 4 * Cmid + 2 * m_pad * 4 * Cmid * 4 * nc,
        transcendentals=0,
        bytes_accessed=(m_pad * Cin * 2 + m_pad * 4 * nc * out_bytes
                        + 4 * Cmid * Cin * 2 + 4 * nc * 4 * Cmid * 4
                        + (4 * Cmid + 4 * nc) * 4),
    )

    out = pl.pallas_call(
        _predictor_kernel,
        out_shape=jax.ShapeDtypeStruct((4 * nc, m_pad), out_dtype),
        grid_spec=pltpu.PrefetchScalarGridSpec(
            num_scalar_prefetch=0,
            grid=(n_steps,),
            in_specs=[
                pl.BlockSpec((Cin, tm), lambda m: (0, m)),          # streamed X^T tile
                pl.BlockSpec((4 * Cmid, Cin), lambda m: (0, 0)),    # resident weights
                pl.BlockSpec((4 * Cmid, 1), lambda m: (0, 0)),
                pl.BlockSpec((4 * nc, 4 * Cmid), lambda m: (0, 0)),
                pl.BlockSpec((4 * nc, 1), lambda m: (0, 0)),
            ],
            out_specs=pl.BlockSpec((4 * nc, tm), lambda m: (0, m)), # lane-dense store
        ),
        compiler_params=pltpu.CompilerParams(
            dimension_semantics=("parallel",),       # M tiles independent
            vmem_limit_bytes=48 * 1024 * 1024,       # headroom under v7x's 64 MiB
        ),
        cost_estimate=cost,
    )(x_t, w1t, b1_all, w2t_bd, b2_all)

    # ---- scatter the 4 taps into the 2x-upsampled NCHW grid ----
    # out[(di*2+dj)*nc + c, (n*H + i)*W + j] -> y[n, c, 2i+di, 2j+dj]
    # TODO(synk): fully fused path would emit [N*H, 2, W, 2*nc] directly from the
    # kernel (TM a multiple of W + in-kernel de-interleave) to drop this pass.
    y = out[:, :M].reshape(2, 2, nc, N, H, W)        # (di, dj, c, n, i, j)
    y = jnp.transpose(y, (3, 2, 4, 0, 5, 1))         # (n, c, i, di, j, dj)
    return y.reshape(N, nc, 2 * H, 2 * W)


def _reference(x_nchw, w1, b1, w2, b2):
    """Pure-JAX reference of the PyTorch forward (independent XLA conv path)."""
    Cin, Cmid, kH, kW = w1.shape
    # PyTorch ConvTranspose2d(stride=2, padding=0) == cross-correlation over the
    # 2x lhs-dilated input, padded by (k-1), with the kernel spatially flipped
    # and its in/out channel axes swapped.
    w1_conv = jnp.transpose(w1, (1, 0, 2, 3))[:, :, ::-1, ::-1]   # [Cmid, Cin, kH, kW]
    h = jax.lax.conv_general_dilated(
        x_nchw, w1_conv, window_strides=(1, 1),
        padding=[(kH - 1, kH - 1), (kW - 1, kW - 1)],
        lhs_dilation=(2, 2),
        dimension_numbers=("NCHW", "OIHW", "NCHW"))
    h = jax.nn.relu(h + b1.reshape(1, -1, 1, 1))
    y = jax.lax.conv_general_dilated(
        h, w2, window_strides=(1, 1), padding="VALID",
        dimension_numbers=("NCHW", "OIHW", "NCHW"))
    return y + b2.reshape(1, -1, 1, 1)


if __name__ == "__main__":
    # Synthetic config: USE_FPN=True -> num_inputs = dim_reduced
    N, Cin, H, W = 2, 32, 8, 8
    Cmid = 32            # dim_reduced = CONV_LAYERS[-1]
    num_classes = 2      # text / background

    key = jax.random.PRNGKey(0)
    kx, k1, k2 = jax.random.split(key, 3)

    x = jax.random.normal(kx, (N, Cin, H, W), dtype=jnp.float32)

    # Deterministic kaiming_normal_(mode='fan_out', nonlinearity='relu'), zero biases.
    gain = 2.0 ** 0.5
    fan_out_1 = Cin * 2 * 2
    w1 = jax.random.normal(k1, (Cin, Cmid, 2, 2), dtype=jnp.float32) * (gain / fan_out_1 ** 0.5)
    b1 = jnp.zeros((Cmid,), dtype=jnp.float32)
    fan_out_2 = num_classes * 1 * 1
    w2 = jax.random.normal(k2, (num_classes, Cmid, 1, 1), dtype=jnp.float32) * (gain / fan_out_2 ** 0.5)
    b2 = jnp.zeros((num_classes,), dtype=jnp.float32)

    y = maskrcnn_c4_predictor(x, w1, b1, w2, b2)
    jax.block_until_ready(y)

    y_ref = _reference(x, w1, b1, w2, b2)
    assert y.shape == (N, num_classes, 2 * H, 2 * W), y.shape
    # Tolerance accounts for bf16 MXU operands of GEMM1 + bf16 logits store
    # (GEMM2 runs in f32) vs the all-f32 XLA reference.
    err = float(jnp.max(jnp.abs(y.astype(jnp.float32) - y_ref)))
    assert err < 2e-1, err

    print("KERNEL_OK")
</pallas_src>

<mosaic_0001>
module attributes {stable_mosaic.version = 11 : i64} {
  func.func @_predictor_kernel(%arg0: i32, %arg1: memref<32x128xbf16, #tpu.memory_space<vmem>>, %arg2: memref<128x32xbf16, #tpu.memory_space<vmem>>, %arg3: memref<128x1xf32, #tpu.memory_space<vmem>>, %arg4: memref<8x128xf32, #tpu.memory_space<vmem>>, %arg5: memref<8x1xf32, #tpu.memory_space<vmem>>, %arg6: memref<8x128xbf16, #tpu.memory_space<vmem>>) attributes {dimension_semantics = [#tpu.dimension_semantics<parallel>], iteration_bounds = array<i64: 2>, scalar_prefetch = 0 : i64, scratch_operands = 0 : i64, tpu.core_type = #tpu.core_type<tc>, window_params = [{transform_indices = @transform_0, window_bounds = array<i64: 32, 128>}, {pipeline_mode = #tpu.pipeline_mode<synchronous>, transform_indices = @transform_1, window_bounds = array<i64: 128, 32>}, {pipeline_mode = #tpu.pipeline_mode<synchronous>, transform_indices = @transform_2, window_bounds = array<i64: 128, 1>}, {pipeline_mode = #tpu.pipeline_mode<synchronous>, transform_indices = @transform_3, window_bounds = array<i64: 8, 128>}, {pipeline_mode = #tpu.pipeline_mode<synchronous>, transform_indices = @transform_4, window_bounds = array<i64: 8, 1>}, {transform_indices = @transform_5, window_bounds = array<i64: 8, 128>}]} {
    %c0 = arith.constant 0 : index
    %c0_0 = arith.constant 0 : index
    %0 = vector.load %arg2[%c0, %c0_0] : memref<128x32xbf16, #tpu.memory_space<vmem>>, vector<128x32xbf16>
    %c0_1 = arith.constant 0 : index
    %c0_2 = arith.constant 0 : index
    %1 = vector.load %arg1[%c0_1, %c0_2] : memref<32x128xbf16, #tpu.memory_space<vmem>>, vector<32x128xbf16>
    %cst = arith.constant dense<0.000000e+00> : vector<128x128xf32>
    %2 = tpu.matmul %0, %1, %cst {dimension_numbers = #tpu.dot_dimension_numbers<[1], [0], [0], [1], [0, 0, 1, 1], [], []>} : vector<128x32xbf16>, vector<32x128xbf16>, vector<128x128xf32> -> vector<128x128xf32>
    %c0_3 = arith.constant 0 : index
    %c0_4 = arith.constant 0 : index
    %3 = vector.load %arg3[%c0_3, %c0_4] : memref<128x1xf32, #tpu.memory_space<vmem>>, vector<128x1xf32>
    %4 = vector.broadcast %3 : vector<128x1xf32> to vector<128x128xf32>
    %5 = arith.addf %2, %4 : vector<128x128xf32>
    %cst_5 = arith.constant 0.000000e+00 : f32
    %6 = vector.broadcast %cst_5 : f32 to vector<128x128xf32>
    %7 = arith.maximumf %5, %6 : vector<128x128xf32>
    %c0_6 = arith.constant 0 : index
    %c0_7 = arith.constant 0 : index
    %8 = vector.load %arg4[%c0_6, %c0_7] : memref<8x128xf32, #tpu.memory_space<vmem>>, vector<8x128xf32>
    %cst_8 = arith.constant dense<0.000000e+00> : vector<8x128xf32>
    %9 = tpu.matmul %8, %7, %cst_8 {dimension_numbers = #tpu.dot_dimension_numbers<[1], [0], [0], [1], [0, 0, 1, 1], [], []>} : vector<8x128xf32>, vector<128x128xf32>, vector<8x128xf32> -> vector<8x128xf32>
    %c0_9 = arith.constant 0 : index
    %c0_10 = arith.constant 0 : index
    %10 = vector.load %arg5[%c0_9, %c0_10] : memref<8x1xf32, #tpu.memory_space<vmem>>, vector<8x1xf32>
    %11 = vector.broadcast %10 : vector<8x1xf32> to vector<8x128xf32>
    %12 = arith.addf %9, %11 : vector<8x128xf32>
    %13 = arith.truncf %12 : vector<8x128xf32> to vector<8x128xbf16>
    %c0_11 = arith.constant 0 : index
    %c0_12 = arith.constant 0 : index
    %14 = vector.load %arg6[%c0_11, %c0_12] : memref<8x128xbf16, #tpu.memory_space<vmem>>, vector<8x128xbf16>
    tpu.vector_store %arg6[%c0_11, %c0_12], %13 {strides = array<i32>} : memref<8x128xbf16, #tpu.memory_space<vmem>>, vector<8x128xbf16>,
    return
  }
  func.func @transform_0(%arg0: i32) -> (i32, i32) {
    %c0_i32 = arith.constant 0 : i32
    %c0_i32_0 = arith.constant 0 : i32
    return %c0_i32, %arg0 : i32, i32
  }
  func.func @transform_1(%arg0: i32) -> (i32, i32) {
    %c0_i32 = arith.constant 0 : i32
    %c0_i32_0 = arith.constant 0 : i32
    %c0_i32_1 = arith.constant 0 : i32
    return %c0_i32, %c0_i32_0 : i32, i32
  }
  func.func @transform_2(%arg0: i32) -> (i32, i32) {
    %c0_i32 = arith.constant 0 : i32
    %c0_i32_0 = arith.constant 0 : i32
    %c0_i32_1 = arith.constant 0 : i32
    return %c0_i32, %c0_i32_0 : i32, i32
  }
  func.func @transform_3(%arg0: i32) -> (i32, i32) {
    %c0_i32 = arith.constant 0 : i32
    %c0_i32_0 = arith.constant 0 : i32
    %c0_i32_1 = arith.constant 0 : i32
    return %c0_i32, %c0_i32_0 : i32, i32
  }
  func.func @transform_4(%arg0: i32) -> (i32, i32) {
    %c0_i32 = arith.constant 0 : i32
    %c0_i32_0 = arith.constant 0 : i32
    %c0_i32_1 = arith.constant 0 : i32
    return %c0_i32, %c0_i32_0 : i32, i32
  }
  func.func @transform_5(%arg0: i32) -> (i32, i32) {
    %c0_i32 = arith.constant 0 : i32
    %c0_i32_0 = arith.constant 0 : i32
    return %c0_i32, %arg0 : i32, i32
  }
}

</mosaic_0001>

<llo_original>
// kernel: tpu_custom_call.1
$region0: #{tpu_custom_call.1}
  #allocation0 [shape = 'u32[]', space=smem, size = 0x4, offset = 0x4, fixed_abs, tag = 'smem constant byte address 0x4 - core index']
  #allocation1 [shape = 'u32[144,128]{1,0:T(1,128)}', space=vmem, size = 0x12000, scoped, tag = 'internal scratch']
  %s0 = inlined_call_operand.vmem [shape: bf16[32,256], index: 0, kind: input, shape index: {}]
  %s1 = inlined_call_operand.vmem [shape: bf16[128,32], index: 1, kind: input, shape index: {}]
  %s2 = inlined_call_operand.vmem [shape: f32[128,1], index: 2, kind: input, shape index: {}]
  %s3 = inlined_call_operand.vmem [shape: f32[8,128], index: 3, kind: input, shape index: {}]
  %s4 = inlined_call_operand.vmem [shape: f32[8,1], index: 4, kind: input, shape index: {}]
  %s5 = inlined_call_operand.hbm [shape: bf16[8,256], index: 5, kind: output, shape index: {}]
  %s6 = sld [smem:[#allocation0]]
  $region94: #{tpu_custom_call.1} parent=0
    _
  %s8 = ssub.s32 1, %s6
  %s9 = scalar_select 0, %s8, %s6
  $region1: #{tpu_custom_call.1} parent=0
    #allocation2 [shape = 'u8[16384]{0}', space=vmem, size = 0x4000, scoped, tag = 'input window, operand 0']
    #allocation3 [shape = 'u8[4096]{0}', space=vmem, size = 0x1000, scoped, tag = 'output window, operand 0']
    #allocation4 [shape = 's32[2]{0}', space=sflag, size = 0x8, scoped, tag = 'scoped memory for tpu_custom_call.1']
    %10 = vsyncpa [#allocation4], 0
    %s11 = scalar_lea.sflag [#allocation4], 1
    %12 = vsyncpa %s11, 0
    loop: start=0, step=1, limit=4
    $region2: #{tpu_custom_call.1} parent=1 // loop_pre_header
      _
    $region3: #{tpu_custom_call.1} parent=1 // loop_header
      %s14 = sphi 0, %s18
      %p15 = scmp.ge.s32.totalorder %s14, 4
      %s24 = sphi 0, %s26
      %s27 = sphi 0, %s24
      %s28 = sphi 0, %s27
      %s44 = sphi 0, %s28
      %s48 = sphi 0, %s48
      %s50 = sphi 0, %s48
      %s51 = sphi 0, %s50
      %s65 = sphi 0, %s51
      %s69 = sphi 0, %s69
      %s71 = sphi 0, %s69
      %s72 = sphi 0, %s71
      %s86 = sphi 0, %s72
      %s90 = sphi 0, %s90
      %s92 = sphi 0, %s90
      %s93 = sphi 0, %s92
      %s107 = sphi 0, %s93
      %s111 = sphi 0, %s111
      %s113 = sphi 0, %s111
      %s114 = sphi 0, %s113
      %s128 = sphi 0, %s114
      %s134 = sphi 0, %s136
      %s137 = sphi 0, %s134
      %s138 = sphi 0, %s137
      %s154 = sphi 0, %s138
    $region4: #{tpu_custom_call.1} parent=1 // loop_header_branch
      %17 = sbr.rel (%p15) target = $region8
    $region5: #{tpu_custom_call.1} parent=1 // loop_body
      %s19 = ssub.s32 %s14, 1
      %s20 = ssub.s32 %s14, 2
      %s21 = sadd.s32 %s14, 1
      %s22 = ssub.s32 %s14, %s21
      %p23 = scmp.eq.s32.totalorder %s22, 0
      %s25 = sadd.s32 %s24, 1
      %s26 = scalar_select %p23, %s24, %s25
      %p29 = pneg %p23
      %p30 = scmp.eq.s32.totalorder %s14, 1
      %p31 = por %p29, %p30
      %p32 = scmp.ne.s32.totalorder %s24, %s27
      %p33 = scmp.eq.s32.totalorder %s14, 0
      %p34 = por %p32, %p33
      %p35 = scmp.ne.s32.totalorder %s24, %s27
      %p36 = scmp.eq.s32.totalorder %s19, 1
      %p37 = por %p35, %p36
      %p38 = scmp.ne.s32.totalorder %s27, %s28
      %p39 = scmp.eq.s32.totalorder %s19, 0
      %p40 = por %p38, %p39
      %p41 = scmp.ne.s32.totalorder %s27, %s28
      %p42 = scmp.eq.s32.totalorder %s20, 1
      %p43 = por %p41, %p42
      %p45 = scmp.ne.s32.totalorder %s28, %s44
      %p46 = scmp.eq.s32.totalorder %s20, 0
      %p47 = por %p45, %p46
      %s49 = sadd.s32 %s48, 1
      %p52 = scmp.eq.s32.totalorder %s14, 1
      %p53 = scmp.ne.s32.totalorder %s48, %s50
      %p54 = scmp.eq.s32.totalorder %s14, 0
      %p55 = por %p53, %p54
      %p56 = scmp.ne.s32.totalorder %s48, %s50
      %p57 = scmp.eq.s32.totalorder %s19, 1
      %p58 = por %p56, %p57
      %p59 = scmp.ne.s32.totalorder %s50, %s51
      %p60 = scmp.eq.s32.totalorder %s19, 0
      %p61 = por %p59, %p60
      %p62 = scmp.ne.s32.totalorder %s50, %s51
      %p63 = scmp.eq.s32.totalorder %s20, 1
      %p64 = por %p62, %p63
      %p66 = scmp.ne.s32.totalorder %s51, %s65
      %p67 = scmp.eq.s32.totalorder %s20, 0
      %p68 = por %p66, %p67
      %s70 = sadd.s32 %s69, 1
      %p73 = scmp.eq.s32.totalorder %s14, 1
      %p74 = scmp.ne.s32.totalorder %s69, %s71
      %p75 = scmp.eq.s32.totalorder %s14, 0
      %p76 = por %p74, %p75
      %p77 = scmp.ne.s32.totalorder %s69, %s71
      %p78 = scmp.eq.s32.totalorder %s19, 1
      %p79 = por %p77, %p78
      %p80 = scmp.ne.s32.totalorder %s71, %s72
      %p81 = scmp.eq.s32.totalorder %s19, 0
      %p82 = por %p80, %p81
      %p83 = scmp.ne.s32.totalorder %s71, %s72
      %p84 = scmp.eq.s32.totalorder %s20, 1
      %p85 = por %p83, %p84
      %p87 = scmp.ne.s32.totalorder %s72, %s86
      %p88 = scmp.eq.s32.totalorder %s20, 0
      %p89 = por %p87, %p88
      %s91 = sadd.s32 %s90, 1
      %p94 = scmp.eq.s32.totalorder %s14, 1
      %p95 = scmp.ne.s32.totalorder %s90, %s92
      %p96 = scmp.eq.s32.totalorder %s14, 0
      %p97 = por %p95, %p96
      %p98 = scmp.ne.s32.totalorder %s90, %s92
      %p99 = scmp.eq.s32.totalorder %s19, 1
      %p100 = por %p98, %p99
      %p101 = scmp.ne.s32.totalorder %s92, %s93
      %p102 = scmp.eq.s32.totalorder %s19, 0
      %p103 = por %p101, %p102
      %p104 = scmp.ne.s32.totalorder %s92, %s93
      %p105 = scmp.eq.s32.totalorder %s20, 1
      %p106 = por %p104, %p105
      %p108 = scmp.ne.s32.totalorder %s93, %s107
      %p109 = scmp.eq.s32.totalorder %s20, 0
      %p110 = por %p108, %p109
      %s112 = sadd.s32 %s111, 1
      %p115 = scmp.eq.s32.totalorder %s14, 1
      %p116 = scmp.ne.s32.totalorder %s111, %s113
      %p117 = scmp.eq.s32.totalorder %s14, 0
      %p118 = por %p116, %p117
      %p119 = scmp.ne.s32.totalorder %s111, %s113
      %p120 = scmp.eq.s32.totalorder %s19, 1
      %p121 = por %p119, %p120
      %p122 = scmp.ne.s32.totalorder %s113, %s114
      %p123 = scmp.eq.s32.totalorder %s19, 0
      %p124 = por %p122, %p123
      %p125 = scmp.ne.s32.totalorder %s113, %s114
      %p126 = scmp.eq.s32.totalorder %s20, 1
      %p127 = por %p125, %p126
      %p129 = scmp.ne.s32.totalorder %s114, %s128
      %p130 = scmp.eq.s32.totalorder %s20, 0
      %p131 = por %p129, %p130
      %s132 = ssub.s32 %s14, %s21
      %p133 = scmp.eq.s32.totalorder %s132, 0
      %s135 = sadd.s32 %s134, 1
      %s136 = scalar_select %p133, %s134, %s135
      %p139 = pneg %p133
      %p140 = scmp.eq.s32.totalorder %s14, 1
      %p141 = por %p139, %p140
      %p142 = scmp.ne.s32.totalorder %s134, %s137
      %p143 = scmp.eq.s32.totalorder %s14, 0
      %p144 = por %p142, %p143
      %p145 = scmp.ne.s32.totalorder %s134, %s137
      %p146 = scmp.eq.s32.totalorder %s19, 1
      %p147 = por %p145, %p146
      %p148 = scmp.ne.s32.totalorder %s137, %s138
      %p149 = scmp.eq.s32.totalorder %s19, 0
      %p150 = por %p148, %p149
      %p151 = scmp.ne.s32.totalorder %s137, %s138
      %p152 = scmp.eq.s32.totalorder %s20, 1
      %p153 = por %p151, %p152
      %p155 = scmp.ne.s32.totalorder %s138, %s154
      %p156 = scmp.eq.s32.totalorder %s20, 0
      %p157 = por %p155, %p156
      %p158 = scmp.le.s32.totalorder 1, %s14
      %p159 = scmp.lt.s32.totalorder %s14, 3
      %p160 = pnand %p158, %p159
      %p161 = pneg %p160
      // Predicated region
      $region9: #{tpu_custom_call.1} parent=5 // pred_check
        _
      $region10: #{tpu_custom_call.1} parent=5 // pred_check_branch
        %163 = sbr.rel (%p160) target = $region12
      $region11: #{tpu_custom_call.1} parent=5 // pred_region
        %s164 = ssub.s32 %s14, 1
        // Predicated region
        $region13: #{tpu_custom_call.1} parent=11 // pred_check
          %p165 = pneg %p61
        $region14: #{tpu_custom_call.1} parent=11 // pred_check_branch
          %167 = sbr.rel (%p165) target = $region16
        $region15: #{tpu_custom_call.1} parent=11 // pred_region
          _
        $region16: #{tpu_custom_call.1} parent=11 // pred_fallthru
          _
        // Predicated region
        $region17: #{tpu_custom_call.1} parent=11 // pred_check
          %p168 = pneg %p82
        $region18: #{tpu_custom_call.1} parent=11 // pred_check_branch
          %170 = sbr.rel (%p168) target = $region20
        $region19: #{tpu_custom_call.1} parent=11 // pred_region
          _
        $region20: #{tpu_custom_call.1} parent=11 // pred_fallthru
          _
        // Predicated region
        $region21: #{tpu_custom_call.1} parent=11 // pred_check
          %p171 = pneg %p103
        $region22: #{tpu_custom_call.1} parent=11 // pred_check_branch
          %173 = sbr.rel (%p171) target = $region24
        $region23: #{tpu_custom_call.1} parent=11 // pred_region
          _
        $region24: #{tpu_custom_call.1} parent=11 // pred_fallthru
          _
        // Predicated region
        $region25: #{tpu_custom_call.1} parent=11 // pred_check
          %p174 = pneg %p124
        $region26: #{tpu_custom_call.1} parent=11 // pred_check_branch
          %176 = sbr.rel (%p174) target = $region28
        $region27: #{tpu_custom_call.1} parent=11 // pred_region
          _
        $region28: #{tpu_custom_call.1} parent=11 // pred_fallthru
          _
      $region12: #{tpu_custom_call.1} parent=5 // pred_fallthru
        _
      %p177 = scmp.lt.s32.totalorder %s14, 2
      // Predicated region
      $region29: #{tpu_custom_call.1} parent=5 // pred_check
        %p178 = pneg %p177
      $region30: #{tpu_custom_call.1} parent=5 // pred_check_branch
        %180 = sbr.rel (%p178) target = $region32
      $region31: #{tpu_custom_call.1} parent=5 // pred_region
        // Predicated region
        $region33: #{tpu_custom_call.1} parent=31 // pred_check
          %p181 = pneg %p34
        $region34: #{tpu_custom_call.1} parent=31 // pred_check_branch
          %183 = sbr.rel (%p181) target = $region36
        $region35: #{tpu_custom_call.1} parent=31 // pred_region
          %s184 = sand.u32 %s24, 1
          %s185 = sand.u32 %s24, 1
          %s186 = smul.addr %s185, 16
          %s187 = scalar_lea.vmem [#allocation2], %s186
          %s188 = smul.addr %s14, 4
          %s189 = scalar_lea.vmem %s0, %s188
          // Predicated region
          $region37: #{tpu_custom_call.1} parent=35 // pred_check
            _
          $region38: #{tpu_custom_call.1} parent=35 // pred_check_branch
            %191 = sbr.rel (0) target = $region40
          $region39: #{tpu_custom_call.1} parent=35 // pred_region
            // Predicated region
            $region41: #{tpu_custom_call.1} parent=39 // pred_check
              _
            $region42: #{tpu_custom_call.1} parent=39 // pred_check_branch
              %193 = sbr.rel target = $region44
            $region43: #{tpu_custom_call.1} parent=39 // pred_region
              // Predicated region
              $region56: #{tpu_custom_call.1} parent=43 // pred_check
                _
              $region57: #{tpu_custom_call.1} parent=43 // pred_check_branch
                %214 = sbr.rel (0) target = $region59
              $region58: #{tpu_custom_call.1} parent=43 // pred_region
                loop: start=0, step=1, limit=1
                $region60: #{tpu_custom_call.1} parent=58 // loop_pre_header
                  _
                $region61: #{tpu_custom_call.1} parent=58 // loop_header
                  %s216 = sphi 0, %s220
                  %p217 = scmp.ge.s32.totalorder %s216, 1
                  %s221 = sphi %s189, %s189
                  %s222 = sphi %s187, %s187
                $region62: #{tpu_custom_call.1} parent=58 // loop_header_branch
                  %219 = sbr.rel (%p217) target = $region66
                $region63: #{tpu_custom_call.1} parent=58 // loop_body
                  _
                $region64: #{tpu_custom_call.1} parent=58 // loop_footer
                  %s220 = sadd.s32 1, %s216
                $region65: #{tpu_custom_call.1} parent=58 // loop_footer_branch
                  %215 = sbr.rel target = $region61
                $region66: #{tpu_custom_call.1} parent=58 // loop_exit
                  _
                loop: start=0, step=1, limit=1
                $region67: #{tpu_custom_call.1} parent=58 // loop_pre_header
                  _
                $region68: #{tpu_custom_call.1} parent=58 // loop_header
                  %s225 = sphi 0, %s229
                  %p226 = scmp.ge.s32.totalorder %s225, 1
                  %s230 = sphi %s189, %s189
                  %s231 = sphi %s187, %s187
                $region69: #{tpu_custom_call.1} parent=58 // loop_header_branch
                  %228 = sbr.rel (%p226) target = $region73
                $region70: #{tpu_custom_call.1} parent=58 // loop_body
                  %v232 = vld [vmem:[%s230] sm:$0xf]
                  %233 = vst [vmem:[%s231] sm:$0xf] %v232
                  %v234 = vld [vmem:[%s230 + $0x8] sm:$0xf]
                  %235 = vst [vmem:[%s231 + $0x4] sm:$0xf] %v234
                  %v236 = vld [vmem:[%s230 + $0x10] sm:$0xf]
                  %237 = vst [vmem:[%s231 + $0x8] sm:$0xf] %v236
                  %v238 = vld [vmem:[%s230 + $0x18] sm:$0xf]
                  %239 = vst [vmem:[%s231 + $0xc] sm:$0xf] %v238
                $region71: #{tpu_custom_call.1} parent=58 // loop_footer
                  %s229 = sadd.s32 1, %s225
                $region72: #{tpu_custom_call.1} parent=58 // loop_footer_branch
                  %224 = sbr.rel target = $region68
                $region73: #{tpu_custom_call.1} parent=58 // loop_exit
                  _
              $region59: #{tpu_custom_call.1} parent=43 // pred_fallthru
                _
            $region44: #{tpu_custom_call.1} parent=39 // pred_fallthru
              _
            // Predicated region
            $region45: #{tpu_custom_call.1} parent=39 // pred_check
              _
            $region46: #{tpu_custom_call.1} parent=39 // pred_check_branch
              %195 = sbr.rel (0) target = $region48
            $region47: #{tpu_custom_call.1} parent=39 // pred_region
              loop: start=0, step=1, limit=1
              $region49: #{tpu_custom_call.1} parent=47 // loop_pre_header
                _
              $region50: #{tpu_custom_call.1} parent=47 // loop_header
                %s198 = sphi 0, %s202
                %p199 = scmp.ge.s32.totalorder %s198, 1
                %s203 = sphi %s189, %s189
                %s204 = sphi %s187, %s187
              $region51: #{tpu_custom_call.1} parent=47 // loop_header_branch
                %201 = sbr.rel (%p199) target = $region55
              $region52: #{tpu_custom_call.1} parent=47 // loop_body
                %v205 = vld [vmem:[%s203] sm:$0xf]
                %206 = vst [vmem:[%s204] sm:$0xf] %v205
                %v207 = vld [vmem:[%s203 + $0x8] sm:$0xf]
                %208 = vst [vmem:[%s204 + $0x4] sm:$0xf] %v207
                %v209 = vld [vmem:[%s203 + $0x10] sm:$0xf]
                %210 = vst [vmem:[%s204 + $0x8] sm:$0xf] %v209
                %v211 = vld [vmem:[%s203 + $0x18] sm:$0xf]
                %212 = vst [vmem:[%s204 + $0xc] sm:$0xf] %v211
              $region53: #{tpu_custom_call.1} parent=47 // loop_footer
                %s202 = sadd.s32 1, %s198
              $region54: #{tpu_custom_call.1} parent=47 // loop_footer_branch
                %197 = sbr.rel target = $region50
              $region55: #{tpu_custom_call.1} parent=47 // loop_exit
                _
            $region48: #{tpu_custom_call.1} parent=39 // pred_fallthru
              _
          $region40: #{tpu_custom_call.1} parent=35 // pred_fallthru
            _
          %240 = vnop
        $region36: #{tpu_custom_call.1} parent=31 // pred_fallthru
          _
      $region32: #{tpu_custom_call.1} parent=5 // pred_fallthru
        _
      %p241 = scmp.le.s32.totalorder 1, %s14
      %p242 = scmp.lt.s32.totalorder %s14, 3
      %p243 = pnand %p241, %p242
      %p244 = pneg %p243
      // Predicated region
      $region74: #{tpu_custom_call.1} parent=5 // pred_check
        _
      $region75: #{tpu_custom_call.1} parent=5 // pred_check_branch
        %246 = sbr.rel (%p243) target = $region77
      $region76: #{tpu_custom_call.1} parent=5 // pred_region
        %s247 = ssub.s32 %s14, 1
        %s248 = sand.u32 %s27, 1
        %s249 = sand.u32 %s27, 1
        %s250 = smul.addr %s249, 16
        %s251 = scalar_lea.vmem [#allocation2], %s250
        // Predicated region
        $region78: #{tpu_custom_call.1} parent=76 // pred_check
          %p252 = pneg %p40
        $region79: #{tpu_custom_call.1} parent=76 // pred_check_branch
          %254 = sbr.rel (%p252) target = $region81
        $region80: #{tpu_custom_call.1} parent=76 // pred_region
          _
        $region81: #{tpu_custom_call.1} parent=76 // pred_fallthru
          _
        %s255 = sand.u32 %s27, 1
        %s256 = sand.u32 %s27, 1
        %s257 = smul.addr %s256, 16
        %s258 = scalar_lea.vmem [#allocation2], %s257
        %p259 = pneg %p40
        %p260 = pneg %p37
        %p261 = pneg %p61
        %p262 = pneg %p58
        %p263 = pneg %p82
        %p264 = pneg %p79
        %p265 = pneg %p103
        %p266 = pneg %p100
        %p267 = pneg %p124
        %p268 = pneg %p121
        %p269 = pneg %p150
        %p270 = pneg %p147
        %s271 = sand.u32 %s137, 1
        %s272 = scalar_lea.sflag [#allocation4], %s271
        %s273 = sand.u32 %s137, 1
        %s274 = smul.addr %s273, 4
        %s275 = scalar_lea.vmem [#allocation3], %s274
        %v277 = vld [vmem:[%s1] sm:$0xf]
        %v278 = vld [vmem:[%s1 + $0x4] sm:$0xf]
        %v279 = vld [vmem:[%s1 + $0x8] sm:$0xf]
        %v280 = vld [vmem:[%s1 + $0xc] sm:$0xf]
        %v281 = vld [vmem:[%s1 + $0x10] sm:$0xf]
        %v282 = vld [vmem:[%s1 + $0x14] sm:$0xf]
        %v283 = vld [vmem:[%s1 + $0x18] sm:$0xf]
        %v284 = vld [vmem:[%s1 + $0x1c] sm:$0xf]
        %v285 = vld [vmem:[%s1 + $0x20] sm:$0xf]
        %v286 = vld [vmem:[%s1 + $0x24] sm:$0xf]
        %v287 = vld [vmem:[%s1 + $0x28] sm:$0xf]
        %v288 = vld [vmem:[%s1 + $0x2c] sm:$0xf]
        %v289 = vld [vmem:[%s1 + $0x30] sm:$0xf]
        %v290 = vld [vmem:[%s1 + $0x34] sm:$0xf]
        %v291 = vld [vmem:[%s1 + $0x38] sm:$0xf]
        %v292 = vld [vmem:[%s1 + $0x3c] sm:$0xf]
        %v293 = vld [vmem:[%s251] sm:$0xf]
        %v294 = vld [vmem:[%s251 + $0x4] sm:$0xf]
        %v295 = vld [vmem:[%s251 + $0x8] sm:$0xf]
        %v296 = vld [vmem:[%s251 + $0xc] sm:$0xf]
        %v297 = vld [vmem:[%s2] sm:$0xff]
        %v298 = vld [vmem:[%s2 + $0x8] sm:$0xff]
        %v299 = vld [vmem:[%s2 + $0x10] sm:$0xff]
        %v300 = vld [vmem:[%s2 + $0x18] sm:$0xff]
        %v301 = vld [vmem:[%s2 + $0x20] sm:$0xff]
        %v302 = vld [vmem:[%s2 + $0x28] sm:$0xff]
        %v303 = vld [vmem:[%s2 + $0x30] sm:$0xff]
        %v304 = vld [vmem:[%s2 + $0x38] sm:$0xff]
        %v305 = vld [vmem:[%s2 + $0x40] sm:$0xff]
        %v306 = vld [vmem:[%s2 + $0x48] sm:$0xff]
        %v307 = vld [vmem:[%s2 + $0x50] sm:$0xff]
        %v308 = vld [vmem:[%s2 + $0x58] sm:$0xff]
        %v309 = vld [vmem:[%s2 + $0x60] sm:$0xff]
        %v310 = vld [vmem:[%s2 + $0x68] sm:$0xff]
        %v311 = vld [vmem:[%s2 + $0x70] sm:$0xff]
        %v312 = vld [vmem:[%s2 + $0x78] sm:$0xff]
        %314 = vset.pattern.permute.xlu0 0
        %315 = vperm.xlu0 %314, %v297
        %v316 = vpop.permute.xlu0 %315
        %319 = vset.pattern.permute.xlu0 0
        %320 = vperm.xlu0 %319, %v298
        %v321 = vpop.permute.xlu0 %320
        %324 = vset.pattern.permute.xlu0 0
        %325 = vperm.xlu0 %324, %v299
        %v326 = vpop.permute.xlu0 %325
        %329 = vset.pattern.permute.xlu0 0
        %330 = vperm.xlu0 %329, %v300
        %v331 = vpop.permute.xlu0 %330
        %334 = vset.pattern.permute.xlu0 0
        %335 = vperm.xlu0 %334, %v301
        %v336 = vpop.permute.xlu0 %335
        %339 = vset.pattern.permute.xlu0 0
        %340 = vperm.xlu0 %339, %v302
        %v341 = vpop.permute.xlu0 %340
        %344 = vset.pattern.permute.xlu0 0
        %345 = vperm.xlu0 %344, %v303
        %v346 = vpop.permute.xlu0 %345
        %349 = vset.pattern.permute.xlu0 0
        %350 = vperm.xlu0 %349, %v304
        %v351 = vpop.permute.xlu0 %350
        %354 = vset.pattern.permute.xlu0 0
        %355 = vperm.xlu0 %354, %v305
        %v356 = vpop.permute.xlu0 %355
        %359 = vset.pattern.permute.xlu0 0
        %360 = vperm.xlu0 %359, %v306
        %v361 = vpop.permute.xlu0 %360
        %364 = vset.pattern.permute.xlu0 0
        %365 = vperm.xlu0 %364, %v307
        %v366 = vpop.permute.xlu0 %365
        %369 = vset.pattern.permute.xlu0 0
        %370 = vperm.xlu0 %369, %v308
        %v371 = vpop.permute.xlu0 %370
        %374 = vset.pattern.permute.xlu0 0
        %375 = vperm.xlu0 %374, %v309
        %v376 = vpop.permute.xlu0 %375
        %379 = vset.pattern.permute.xlu0 0
        %380 = vperm.xlu0 %379, %v310
        %v381 = vpop.permute.xlu0 %380
        %384 = vset.pattern.permute.xlu0 0
        %385 = vperm.xlu0 %384, %v311
        %v386 = vpop.permute.xlu0 %385
        %389 = vset.pattern.permute.xlu0 0
        %390 = vperm.xlu0 %389, %v312
        %v391 = vpop.permute.xlu0 %390
        %v409 = vunpack.c.l.b16 %v277
        %v410 = vunpack.c.l.b16 %v278
        %v411 = vunpack.c.l.b16 %v279
        %v412 = vunpack.c.l.b16 %v280
        %v413 = vunpack.c.l.b16 %v281
        %v414 = vunpack.c.l.b16 %v282
        %v415 = vunpack.c.l.b16 %v283
        %v416 = vunpack.c.l.b16 %v284
        %v417 = vunpack.c.l.b16 %v285
        %v418 = vunpack.c.l.b16 %v286
        %v419 = vunpack.c.l.b16 %v287
        %v420 = vunpack.c.l.b16 %v288
        %v421 = vunpack.c.l.b16 %v289
        %v422 = vunpack.c.l.b16 %v290
        %v423 = vunpack.c.l.b16 %v291
        %v424 = vunpack.c.l.b16 %v292
        %v425 = vpack.c.b16 %v410, %v409
        %v426 = vpack.c.b16 %v412, %v411
        %v427 = vpack.c.b16 %v414, %v413
        %v428 = vpack.c.b16 %v416, %v415
        %v429 = vpack.c.b16 %v418, %v417
        %v430 = vpack.c.b16 %v420, %v419
        %v431 = vpack.c.b16 %v422, %v421
        %v432 = vpack.c.b16 %v424, %v423
        %v437 = vunpack.c.l.b16 %v293
        %v438 = vunpack.c.l.b16 %v294
        %v439 = vunpack.c.l.b16 %v295
        %v440 = vunpack.c.l.b16 %v296
        %v441 = vpack.c.b16 %v438, %v437
        %v442 = vpack.c.b16 %v440, %v439
        %vm445 = vcmask 261120
        %v447 = vsel %vm445, %v425, 0
        %v450 = vsel %vm445, %v426, 0
        %v453 = vsel %vm445, %v427, 0
        %v456 = vsel %vm445, %v428, 0
        %v459 = vsel %vm445, %v429, 0
        %v462 = vsel %vm445, %v430, 0
        %v465 = vsel %vm445, %v431, 0
        %v468 = vsel %vm445, %v432, 0
        %470 = vmatprep.subr.bf16.mxu0 0
        %471 = vmatpush1.bf16.msra.mxu0 %v441
        %472 = vmatprep.subr.bf16.mxu0 0
        %473 = vmatpush1.bf16.msra.mxu0 %v442
        %474 = vmatprep.subr.bf16.mxu0 0
        %475 = vmatpush1.bf16.msra.mxu0 0
        %476 = vmatprep.subr.bf16.mxu0 0
        %477 = vmatpush1.bf16.msra.mxu0 0
        %478 = vmatprep.subr.bf16.mxu0 0
        %479 = vmatpush1.bf16.msra.mxu0 0
        %480 = vmatprep.subr.bf16.mxu0 0
        %481 = vmatpush1.bf16.msra.mxu0 0
        %482 = vmatprep.subr.bf16.mxu0 0
        %483 = vmatpush1.bf16.msra.mxu0 0
        %484 = vmatprep.subr.bf16.mxu0 0
        %485 = vmatpush1.bf16.msra.mxu0 0
        %486 = vmatprep.subr.bf16.mxu0 0
        %487 = vmatpush1.bf16.msra.mxu0 0
        %488 = vmatprep.subr.bf16.mxu0 0
        %489 = vmatpush1.bf16.msra.mxu0 0
        %490 = vmatprep.subr.bf16.mxu0 0
        %491 = vmatpush1.bf16.msra.mxu0 0
        %492 = vmatprep.subr.bf16.mxu0 0
        %493 = vmatpush1.bf16.msra.mxu0 0
        %494 = vmatprep.subr.bf16.mxu0 0
        %495 = vmatpush1.bf16.msra.mxu0 0
        %496 = vmatprep.subr.bf16.mxu0 0
        %497 = vmatpush1.bf16.msra.mxu0 0
        %498 = vmatprep.subr.bf16.mxu0 0
        %499 = vmatpush1.bf16.msra.mxu0 0
        %500 = vmatprep.subr.bf16.mxu0 0
        %501 = vmatpush1.bf16.msra.mxu0 0
        %502 = vmatprep.mubr.bf16.mxu0 0
        %503 = vmatmul.mubr.bf16.gmra.mrb[0].mxu0 %v447
        %v504 = vpop.f32.mrb[0].mxu0
        %v505 = vadd.f32 %v316, %v504
        %v506 = vpop.f32.mrb[0].mxu0
        %v507 = vpop.f32.mrb[0].mxu0
        %v508 = vadd.f32 %v321, %v507
        %v509 = vpop.f32.mrb[0].mxu0
        %510 = vmatprep.mubr.bf16.mxu0 0
        %511 = vmatmul.mubr.bf16.gmra.mrb[0].mxu0 %v450
        %v512 = vpop.f32.mrb[0].mxu0
        %v513 = vadd.f32 %v326, %v512
        %v514 = vpop.f32.mrb[0].mxu0
        %v515 = vpop.f32.mrb[0].mxu0
        %v516 = vadd.f32 %v331, %v515
        %v517 = vpop.f32.mrb[0].mxu0
        %518 = vmatprep.mubr.bf16.mxu0 0
        %519 = vmatmul.mubr.bf16.gmra.mrb[0].mxu0 %v453
        %v520 = vpop.f32.mrb[0].mxu0
        %v521 = vadd.f32 %v336, %v520
        %v522 = vpop.f32.mrb[0].mxu0
        %v523 = vpop.f32.mrb[0].mxu0
        %v524 = vadd.f32 %v341, %v523
        %v525 = vpop.f32.mrb[0].mxu0
        %526 = vmatprep.mubr.bf16.mxu0 0
        %527 = vmatmul.mubr.bf16.gmra.mrb[0].mxu0 %v456
        %v528 = vpop.f32.mrb[0].mxu0
        %v529 = vadd.f32 %v346, %v528
        %v530 = vpop.f32.mrb[0].mxu0
        %v531 = vpop.f32.mrb[0].mxu0
        %v532 = vadd.f32 %v351, %v531
        %v533 = vpop.f32.mrb[0].mxu0
        %534 = vmatprep.mubr.bf16.mxu0 0
        %535 = vmatmul.mubr.bf16.gmra.mrb[0].mxu0 %v459
        %v536 = vpop.f32.mrb[0].mxu0
        %v537 = vadd.f32 %v356, %v536
        %v538 = vpop.f32.mrb[0].mxu0
        %v539 = vpop.f32.mrb[0].mxu0
        %v540 = vadd.f32 %v361, %v539
        %v541 = vpop.f32.mrb[0].mxu0
        %542 = vmatprep.mubr.bf16.mxu0 0
        %543 = vmatmul.mubr.bf16.gmra.mrb[0].mxu0 %v462
        %v544 = vpop.f32.mrb[0].mxu0
        %v545 = vadd.f32 %v366, %v544
        %v546 = vpop.f32.mrb[0].mxu0
        %v547 = vpop.f32.mrb[0].mxu0
        %v548 = vadd.f32 %v371, %v547
        %v549 = vpop.f32.mrb[0].mxu0
        %550 = vmatprep.mubr.bf16.mxu0 0
        %551 = vmatmul.mubr.bf16.gmra.mrb[0].mxu0 %v465
        %v552 = vpop.f32.mrb[0].mxu0
        %v553 = vadd.f32 %v376, %v552
        %v554 = vpop.f32.mrb[0].mxu0
        %v555 = vpop.f32.mrb[0].mxu0
        %v556 = vadd.f32 %v381, %v555
        %v557 = vpop.f32.mrb[0].mxu0
        %558 = vmatprep.mubr.bf16.mxu0 0
        %559 = vmatmul.mubr.bf16.gmra.mrb[0].mxu0 %v468
        %v560 = vpop.f32.mrb[0].mxu0
        %v561 = vadd.f32 %v386, %v560
        %v562 = vpop.f32.mrb[0].mxu0
        %v563 = vpop.f32.mrb[0].mxu0
        %v564 = vadd.f32 %v391, %v563
        %v565 = vpop.f32.mrb[0].mxu0
        %566 = vdwg.mxu0
        %v567 = vmax.f32 %v505, 0.0
        %v568 = vmax.f32 %v508, 0.0
        %v569 = vmax.f32 %v513, 0.0
        %v570 = vmax.f32 %v516, 0.0
        %v571 = vmax.f32 %v521, 0.0
        %v572 = vmax.f32 %v524, 0.0
        %v573 = vmax.f32 %v529, 0.0
        %v574 = vmax.f32 %v532, 0.0
        %v575 = vmax.f32 %v537, 0.0
        %v576 = vmax.f32 %v540, 0.0
        %v577 = vmax.f32 %v545, 0.0
        %v578 = vmax.f32 %v548, 0.0
        %v579 = vmax.f32 %v553, 0.0
        %v580 = vmax.f32 %v556, 0.0
        %v581 = vmax.f32 %v561, 0.0
        %v582 = vmax.f32 %v564, 0.0
        %v583 = vld [vmem:[%s3] sm:$0xff]
        %v584 = vld [vmem:[%s4] sm:$0xff]
        %586 = vset.pattern.permute.xlu0 0
        %587 = vperm.xlu0 %586, %v584
        %v588 = vpop.permute.xlu0 %587
        %590 = vmatprep.subr.mxu0 0.0
        %591 = vmatpush1.msra.mxu0 %v567
        %592 = vmatprep.subr.mxu0 0.0
        %593 = vmatpush1.msra.mxu0 %v568
        %594 = vmatprep.subr.mxu0 0.0
        %595 = vmatpush1.msra.mxu0 %v569
        %596 = vmatprep.subr.mxu0 0.0
        %597 = vmatpush1.msra.mxu0 %v570
        %598 = vmatprep.subr.mxu0 0.0
        %599 = vmatpush1.msra.mxu0 %v571
        %600 = vmatprep.subr.mxu0 0.0
        %601 = vmatpush1.msra.mxu0 %v572
        %602 = vmatprep.subr.mxu0 0.0
        %603 = vmatpush1.msra.mxu0 %v573
        %604 = vmatprep.subr.mxu0 0.0
        %605 = vmatpush1.msra.mxu0 %v574
        %606 = vmatprep.subr.mxu0 0.0
        %607 = vmatpush1.msra.mxu0 %v575
        %608 = vmatprep.subr.mxu0 0.0
        %609 = vmatpush1.msra.mxu0 %v576
        %610 = vmatprep.subr.mxu0 0.0
        %611 = vmatpush1.msra.mxu0 %v577
        %612 = vmatprep.subr.mxu0 0.0
        %613 = vmatpush1.msra.mxu0 %v578
        %614 = vmatprep.subr.mxu0 0.0
        %615 = vmatpush1.msra.mxu0 %v579
        %616 = vmatprep.subr.mxu0 0.0
        %617 = vmatpush1.msra.mxu0 %v580
        %618 = vmatprep.subr.mxu0 0.0
        %619 = vmatpush1.msra.mxu0 %v581
        %620 = vmatprep.subr.mxu0 0.0
        %621 = vmatpush1.msra.mxu0 %v582
        %622 = vmatprep.subr.mxu0 0.0
        %623 = vmatpush1.msra.mxu0 0.0
        %624 = vmatprep.subr.mxu0 0.0
        %625 = vmatpush1.msra.mxu0 0.0
        %626 = vmatprep.subr.mxu0 0.0
        %627 = vmatpush1.msra.mxu0 0.0
        %628 = vmatprep.subr.mxu0 0.0
        %629 = vmatpush1.msra.mxu0 0.0
        %630 = vmatprep.subr.mxu0 0.0
        %631 = vmatpush1.msra.mxu0 0.0
        %632 = vmatprep.subr.mxu0 0.0
        %633 = vmatpush1.msra.mxu0 0.0
        %634 = vmatprep.subr.mxu0 0.0
        %635 = vmatpush1.msra.mxu0 0.0
        %636 = vmatprep.subr.mxu0 0.0
        %637 = vmatpush1.msra.mxu0 0.0
        %638 = vmatprep.subr.mxu0 0.0
        %639 = vmatpush1.msra.mxu0 0.0
        %640 = vmatprep.subr.mxu0 0.0
        %641 = vmatpush1.msra.mxu0 0.0
        %642 = vmatprep.subr.mxu0 0.0
        %643 = vmatpush1.msra.mxu0 0.0
        %644 = vmatprep.subr.mxu0 0.0
        %645 = vmatpush1.msra.mxu0 0.0
        %646 = vmatprep.subr.mxu0 0.0
        %647 = vmatpush1.msra.mxu0 0.0
        %648 = vmatprep.subr.mxu0 0.0
        %649 = vmatpush1.msra.mxu0 0.0
        %650 = vmatprep.subr.mxu0 0.0
        %651 = vmatpush1.msra.mxu0 0.0
        %652 = vmatprep.subr.mxu0 0.0
        %653 = vmatpush1.msra.mxu0 0.0
        %654 = vmatprep.mubr.f32.mxu0 0.0
        %655 = vmatmul.mubr.f32.gmra.mrb[0].mxu0 %v583
        %v656 = vpop.f32.mrb[0].mxu0
        %v657 = vadd.f32 %v588, %v656
        %v658 = vpop.f32.mrb[0].mxu0
        %659 = vdwg.mxu0
        %v660 = vpack.c.bf16 %v657, %v657
        %661 = vst [vmem:[%s275] sm:$0xf] %v660
        %s662 = sand.u32 %s137, 1
        %s663 = scalar_lea.sflag [#allocation4], %s662
        %s664 = sand.u32 %s137, 1
        %s665 = smul.addr %s664, 4
        %s666 = scalar_lea.vmem [#allocation3], %s665
        // Predicated region
        $region82: #{tpu_custom_call.1} parent=76 // pred_check
          %p667 = pneg %p147
        $region83: #{tpu_custom_call.1} parent=76 // pred_check_branch
          %669 = sbr.rel (%p667) target = $region85
        $region84: #{tpu_custom_call.1} parent=76 // pred_region
          %s671 = ssub.s32 64, 64
          %672 = vsyncadd %s663, %s671
          %s673 = smul.addr %s19, 64
          %s674 = scalar_lea.hbm %s5, %s673
          %s676 = sshll.u32 %s666, 4
          %s677 = int_to_ptr.vmem [resolvable:$true] %s676
          %679 = dma.vmem_to_hbm [thread:$0]  %s677, 64, %s674, %s663
        $region85: #{tpu_custom_call.1} parent=76 // pred_fallthru
          _
      $region77: #{tpu_custom_call.1} parent=5 // pred_fallthru
        _
      %p680 = scmp.le.s32.totalorder 2, %s14
      // Predicated region
      $region86: #{tpu_custom_call.1} parent=5 // pred_check
        %p681 = pneg %p680
      $region87: #{tpu_custom_call.1} parent=5 // pred_check_branch
        %683 = sbr.rel (%p681) target = $region89
      $region88: #{tpu_custom_call.1} parent=5 // pred_region
        %s684 = ssub.s32 %s14, 2
        // Predicated region
        $region90: #{tpu_custom_call.1} parent=88 // pred_check
          %p685 = pneg %p153
        $region91: #{tpu_custom_call.1} parent=88 // pred_check_branch
          %687 = sbr.rel (%p685) target = $region93
        $region92: #{tpu_custom_call.1} parent=88 // pred_region
          %s688 = sand.u32 %s138, 1
          %s689 = scalar_lea.sflag [#allocation4], %s688
          %s690 = sand.u32 %s138, 1
          %s691 = smul.addr %s690, 4
          %s692 = scalar_lea.vmem [#allocation3], %s691
          %693 = dma.done %s689, 64
        $region93: #{tpu_custom_call.1} parent=88 // pred_fallthru
          _
      $region89: #{tpu_custom_call.1} parent=5 // pred_fallthru
        _
    $region6: #{tpu_custom_call.1} parent=1 // loop_footer
      %s18 = sadd.s32 1, %s14
    $region7: #{tpu_custom_call.1} parent=1 // loop_footer_branch
      %13 = sbr.rel target = $region3
    $region8: #{tpu_custom_call.1} parent=1 // loop_exit
      _
    %694 = vsyncpa [#allocation4], 1
    %s695 = scalar_lea.sflag [#allocation4], 1
    %696 = vsyncpa %s695, 1

</llo_original>
